<compile_context>
chip_gen: v5e
topology: v5e:2x2
jax: 0.10.0
libtpu: 0.0.40
codegen_flags: <defaults>
</compile_context>

<pallas_src>
import math

import jax
import jax.numpy as jnp
from jax.experimental import pallas as pl
from jax.experimental.pallas import tpu as pltpu

LANE = 128


def _round_up(x, m):
    return ((x + m - 1) // m) * m


def _cdiv(a, b):
    return -(-a // b)


# ----------------------------------------------------------------------------
# Feature probes / hardware queries (run once, outside the hot path)
# ----------------------------------------------------------------------------
_SINGLE_BUFFER_OK = None


def _single_buffer_ok():
    """Probe whether BlockSpec(pipeline_mode=pl.Buffered(1)) compiles, runs and
    is numerically correct on this jax/libtpu; otherwise fall back to the
    default double-buffering (correct, just uses 2x weight VMEM)."""
    global _SINGLE_BUFFER_OK
    if _SINGLE_BUFFER_OK is not None:
        return _SINGLE_BUFFER_OK
    try:
        w_spec = pl.BlockSpec((8, LANE), lambda i: (0, 0),
                              pipeline_mode=pl.Buffered(1))

        def k(x_ref, w_ref, o_ref):
            o_ref[...] = x_ref[...] + w_ref[...]

        x = jnp.zeros((16, LANE), jnp.float32)
        w = jnp.ones((8, LANE), jnp.float32)
        out = pl.pallas_call(
            k,
            out_shape=jax.ShapeDtypeStruct((16, LANE), jnp.float32),
            grid=(2,),
            in_specs=[pl.BlockSpec((8, LANE), lambda i: (i, 0)), w_spec],
            out_specs=pl.BlockSpec((8, LANE), lambda i: (i, 0)),
        )(x, w)
        jax.block_until_ready(out)
        _SINGLE_BUFFER_OK = bool(jnp.all(out == 1.0))
    except Exception:
        _SINGLE_BUFFER_OK = False
    return _SINGLE_BUFFER_OK


def _vmem_budget_bytes():
    """Generation-aware usable-VMEM budget (leave ~25% headroom for compiler
    scratch): ~48 MiB on v7x (64 MiB VMEM), ~96 MiB on v5e/v6e (128 MiB)."""
    try:
        cap = int(pltpu.get_tpu_info().vmem_capacity_bytes)
    except Exception:
        cap = 64 * 1024 * 1024          # conservative (v7x) default
    return (cap * 3) // 4


# ----------------------------------------------------------------------------
# Parameters
# ----------------------------------------------------------------------------
def init_mlp_params(key, input_dim, hidden_dim, output_dim, num_layers,
                    initializer="xavier"):
    """Deterministic parameter init matching MLP.weights_init().

    Weights stored as (in_features, out_features) so y = x @ W + b matches
    torch's nn.Linear (torch stores the transpose)."""
    dims = [input_dim] + [hidden_dim] * num_layers + [output_dim]
    params = []
    for i in range(len(dims) - 1):
        fan_in, fan_out = dims[i], dims[i + 1]
        key, sub = jax.random.split(key)
        if initializer == "xavier":
            bound = math.sqrt(6.0 / (fan_in + fan_out))
        elif initializer == "he":
            # kaiming_uniform_ with nonlinearity='relu': gain = sqrt(2)
            bound = math.sqrt(2.0) * math.sqrt(3.0 / fan_in)
        else:
            raise ValueError("Initializer not understood")
        w = jax.random.uniform(sub, (fan_in, fan_out), jnp.float32,
                               minval=-bound, maxval=bound)
        b = jnp.zeros((fan_out,), jnp.float32)
        params.append((w, b))
    return params


def prepare_params(params, compute_dtype=jnp.bfloat16):
    """One-time (outside the hot path) padding of every layer to lane-dense
    shapes and cast of the weights to the MXU compute dtype (bf16).

    Zero padding is exact: padded input lanes are zero, padded weight rows/cols
    and bias lanes are zero, so padded output lanes stay 0 through Linear+ReLU
    and are sliced off at the end.

    Note: 128-lane padding already matches v5e's 128x128 MXU; on v6e/v7x
    (256-wide MXUs) prefer hidden sizes that are native 256-multiples."""
    prepared = []
    for (w, b) in params:
        k, n = w.shape
        kp, np_ = _round_up(k, LANE), _round_up(n, LANE)
        w_p = jnp.zeros((kp, np_), compute_dtype).at[:k, :n].set(
            w.astype(compute_dtype))
        b_p = jnp.zeros((1, np_), jnp.float32).at[0, :n].set(b)
        prepared.append((w_p, b_p))
    return prepared


# ----------------------------------------------------------------------------
# Fused forward
# ----------------------------------------------------------------------------
def mlp_forward(prepared_params, x, output_dim, *, tm_desired=512,
                out_dtype=jnp.float32):
    """Fused forward pass: all Linear(+ReLU) layers and the final
    Linear+Sigmoid run inside one pallas_call, activations VMEM-resident."""
    num_layers_total = len(prepared_params)
    compute_dtype = prepared_params[0][0].dtype
    cbytes = jnp.dtype(compute_dtype).itemsize
    out_bytes = jnp.dtype(out_dtype).itemsize

    M, K = x.shape
    din_p = prepared_params[0][0].shape[0]
    dout_p = prepared_params[-1][0].shape[1]

    single_buf = _single_buffer_ok()
    wbuf = 1 if single_buf else 2

    # ---- batch tiling --------------------------------------------------------
    # Aim for >=2 balanced tiles so the "parallel" grid axis actually shards
    # across both TensorCores on v7x; big tiles otherwise to amortize the
    # ~0.35 us per-grid-step overhead.
    if M <= 2 * tm_desired:
        tm = max(8, _round_up(_cdiv(M, 2), 8))
    else:
        tm = tm_desired

    # ---- VMEM budget (generation-aware) --------------------------------------
    w_resident = sum(w.shape[0] * w.shape[1] * cbytes + w.shape[1] * 4
                     for (w, _) in prepared_params) * wbuf
    max_np = max([din_p] + [w.shape[1] for (w, _) in prepared_params])

    def est_vmem(tm_):
        e = 2 * tm_ * din_p * 4                  # input tile (2-buf, worst-case f32)
        e += 2 * tm_ * dout_p * out_bytes        # output tile (2-buf)
        e += w_resident                          # resident weights + biases
        e += 4 * tm_ * max_np * 4                # live intermediate activations
        return e

    budget = _vmem_budget_bytes()
    while est_vmem(tm) > budget and tm > 8:
        tm = max(8, _round_up(tm // 2, 8))
    if est_vmem(tm) > budget:
        # TODO(synk): layer-stream stacked hidden weights over a layer grid
        # axis instead of failing when resident weights alone exceed VMEM.
        raise ValueError(
            "Fused MLP weights exceed the VMEM budget on this chip")
    vmem_limit = int(min(budget, max(32 * 1024 * 1024, 2 * est_vmem(tm))))

    mp = _cdiv(M, tm) * tm

    # ---- input handling ------------------------------------------------------
    needs_pad = (mp != M) or (din_p != K)
    if needs_pad:
        # Pad rows to the tile and features to 128 lanes; cast once to bf16
        # (halves the kernel's input DMA since a materialization is unavoidable).
        x_in = jnp.zeros((mp, din_p), compute_dtype).at[:M, :K].set(
            x.astype(compute_dtype))
    else:
        # Already aligned: skip the wrapper-side pad/cast HBM pass entirely and
        # cast inside the kernel (VPU work hidden under the MXU).
        x_in = x

    # ---- kernel --------------------------------------------------------------
    def kernel(x_ref, *refs):
        o_ref = refs[-1]
        h = x_ref[...]                                  # (tm, din_p)
        for li in range(num_layers_total):
            w_ref = refs[2 * li]
            b_ref = refs[2 * li + 1]
            # bf16 x bf16 on the MXU, f32 accumulation; bias folded into the
            # epilogue (one vadd per tile per layer).
            y = jnp.dot(h.astype(w_ref.dtype), w_ref[...],
                        preferred_element_type=jnp.float32) + b_ref[...]
            if li < num_layers_total - 1:
                # ReLU; dropout is the identity in eval mode.
                h = jnp.maximum(y, 0.0).astype(compute_dtype)
            else:
                h = jax.nn.sigmoid(y)                   # EUP, f32
        o_ref[...] = h.astype(o_ref.dtype)

    # ---- specs ---------------------------------------------------------------
    wb_kwargs = {"pipeline_mode": pl.Buffered(1)} if single_buf else {}

    in_specs = [pl.BlockSpec((tm, din_p), lambda i: (i, 0))]      # x tile
    flat_inputs = [x_in]
    for (w_p, b_p) in prepared_params:
        kp, np_ = w_p.shape
        # Constant index maps -> weights/biases DMA'd once, VMEM-resident
        # across all batch tiles; single-buffered when supported.
        in_specs.append(pl.BlockSpec((kp, np_), lambda i: (0, 0), **wb_kwargs))
        in_specs.append(pl.BlockSpec((1, np_), lambda i: (0, 0), **wb_kwargs))
        flat_inputs += [w_p, b_p]

    out = pl.pallas_call(
        kernel,
        out_shape=jax.ShapeDtypeStruct((mp, dout_p), out_dtype),
        grid_spec=pltpu.PrefetchScalarGridSpec(
            num_scalar_prefetch=0,
            grid=(mp // tm,),
            in_specs=in_specs,
            out_specs=pl.BlockSpec((tm, dout_p), lambda i: (i, 0)),
        ),
        compiler_params=pltpu.CompilerParams(
            dimension_semantics=("parallel",),
            vmem_limit_bytes=vmem_limit,
        ),
    )(*flat_inputs)

    return out[:M, :output_dim]


def mlp_reference(params, x):
    """Pure-JAX f32 reference for correctness checking."""
    for (w, b) in params[:-1]:
        x = jnp.maximum(x @ w + b, 0.0)
    w, b = params[-1]
    return jax.nn.sigmoid(x @ w + b)


if __name__ == "__main__":
    batch = 16
    input_dim = 32
    hidden_dim = 32
    output_dim = 4
    num_layers = 2

    key = jax.random.PRNGKey(0)
    key, xkey = jax.random.split(key)
    x = jax.random.normal(xkey, (batch, input_dim), jnp.float32)

    params = init_mlp_params(key, input_dim, hidden_dim, output_dim,
                             num_layers, initializer="xavier")
    prepared = prepare_params(params, compute_dtype=jnp.bfloat16)

    fwd = jax.jit(lambda xs: mlp_forward(prepared, xs, output_dim))
    out = jax.block_until_ready(fwd(x))

    ref = mlp_reference(params, x)
    assert out.shape == (batch, output_dim), out.shape
    max_err = float(jnp.max(jnp.abs(out - ref)))
    assert jnp.allclose(out, ref, atol=3e-2, rtol=3e-2), max_err

    print("KERNEL_OK")
</pallas_src>

<mosaic_0001>
module attributes {stable_mosaic.version = 11 : i64} {
  func.func @kernel(%arg0: i32, %arg1: memref<8x128xbf16, #tpu.memory_space<vmem>>, %arg2: memref<128x128xbf16, #tpu.memory_space<vmem>>, %arg3: memref<1x128xf32, #tpu.memory_space<vmem>>, %arg4: memref<128x128xbf16, #tpu.memory_space<vmem>>, %arg5: memref<1x128xf32, #tpu.memory_space<vmem>>, %arg6: memref<128x128xbf16, #tpu.memory_space<vmem>>, %arg7: memref<1x128xf32, #tpu.memory_space<vmem>>, %arg8: memref<8x128xf32, #tpu.memory_space<vmem>>) attributes {dimension_semantics = [#tpu.dimension_semantics<parallel>], iteration_bounds = array<i64: 2>, scalar_prefetch = 0 : i64, scratch_operands = 0 : i64, tpu.core_type = #tpu.core_type<tc>, window_params = [{transform_indices = @transform_0, window_bounds = array<i64: 8, 128>}, {pipeline_mode = #tpu.pipeline_mode<synchronous>, transform_indices = @transform_1, window_bounds = array<i64: 128, 128>}, {pipeline_mode = #tpu.pipeline_mode<synchronous>, transform_indices = @transform_2, window_bounds = array<i64: 1, 128>}, {pipeline_mode = #tpu.pipeline_mode<synchronous>, transform_indices = @transform_3, window_bounds = array<i64: 128, 128>}, {pipeline_mode = #tpu.pipeline_mode<synchronous>, transform_indices = @transform_4, window_bounds = array<i64: 1, 128>}, {pipeline_mode = #tpu.pipeline_mode<synchronous>, transform_indices = @transform_5, window_bounds = array<i64: 128, 128>}, {pipeline_mode = #tpu.pipeline_mode<synchronous>, transform_indices = @transform_6, window_bounds = array<i64: 1, 128>}, {transform_indices = @transform_7, window_bounds = array<i64: 8, 128>}]} {
    %c0 = arith.constant 0 : index
    %c0_0 = arith.constant 0 : index
    %0 = vector.load %arg1[%c0, %c0_0] : memref<8x128xbf16, #tpu.memory_space<vmem>>, vector<8x128xbf16>
    %c0_1 = arith.constant 0 : index
    %c0_2 = arith.constant 0 : index
    %1 = vector.load %arg2[%c0_1, %c0_2] : memref<128x128xbf16, #tpu.memory_space<vmem>>, vector<128x128xbf16>
    %cst = arith.constant dense<0.000000e+00> : vector<8x128xf32>
    %2 = tpu.matmul %0, %1, %cst {dimension_numbers = #tpu.dot_dimension_numbers<[1], [0], [0], [1], [0, 0, 1, 1], [], []>} : vector<8x128xbf16>, vector<128x128xbf16>, vector<8x128xf32> -> vector<8x128xf32>
    %c0_3 = arith.constant 0 : index
    %c0_4 = arith.constant 0 : index
    %3 = vector.load %arg3[%c0_3, %c0_4] : memref<1x128xf32, #tpu.memory_space<vmem>>, vector<1x128xf32>
    %4 = vector.broadcast %3 : vector<1x128xf32> to vector<8x128xf32>
    %5 = arith.addf %2, %4 : vector<8x128xf32>
    %cst_5 = arith.constant 0.000000e+00 : f32
    %6 = vector.broadcast %cst_5 : f32 to vector<8x128xf32>
    %7 = arith.maximumf %5, %6 : vector<8x128xf32>
    %8 = arith.truncf %7 : vector<8x128xf32> to vector<8x128xbf16>
    %c0_6 = arith.constant 0 : index
    %c0_7 = arith.constant 0 : index
    %9 = vector.load %arg4[%c0_6, %c0_7] : memref<128x128xbf16, #tpu.memory_space<vmem>>, vector<128x128xbf16>
    %cst_8 = arith.constant dense<0.000000e+00> : vector<8x128xf32>
    %10 = tpu.matmul %8, %9, %cst_8 {dimension_numbers = #tpu.dot_dimension_numbers<[1], [0], [0], [1], [0, 0, 1, 1], [], []>} : vector<8x128xbf16>, vector<128x128xbf16>, vector<8x128xf32> -> vector<8x128xf32>
    %c0_9 = arith.constant 0 : index
    %c0_10 = arith.constant 0 : index
    %11 = vector.load %arg5[%c0_9, %c0_10] : memref<1x128xf32, #tpu.memory_space<vmem>>, vector<1x128xf32>
    %12 = vector.broadcast %11 : vector<1x128xf32> to vector<8x128xf32>
    %13 = arith.addf %10, %12 : vector<8x128xf32>
    %cst_11 = arith.constant 0.000000e+00 : f32
    %14 = vector.broadcast %cst_11 : f32 to vector<8x128xf32>
    %15 = arith.maximumf %13, %14 : vector<8x128xf32>
    %16 = arith.truncf %15 : vector<8x128xf32> to vector<8x128xbf16>
    %c0_12 = arith.constant 0 : index
    %c0_13 = arith.constant 0 : index
    %17 = vector.load %arg6[%c0_12, %c0_13] : memref<128x128xbf16, #tpu.memory_space<vmem>>, vector<128x128xbf16>
    %cst_14 = arith.constant dense<0.000000e+00> : vector<8x128xf32>
    %18 = tpu.matmul %16, %17, %cst_14 {dimension_numbers = #tpu.dot_dimension_numbers<[1], [0], [0], [1], [0, 0, 1, 1], [], []>} : vector<8x128xbf16>, vector<128x128xbf16>, vector<8x128xf32> -> vector<8x128xf32>
    %c0_15 = arith.constant 0 : index
    %c0_16 = arith.constant 0 : index
    %19 = vector.load %arg7[%c0_15, %c0_16] : memref<1x128xf32, #tpu.memory_space<vmem>>, vector<1x128xf32>
    %20 = vector.broadcast %19 : vector<1x128xf32> to vector<8x128xf32>
    %21 = arith.addf %18, %20 : vector<8x128xf32>
    %22 = arith.negf %21 : vector<8x128xf32>
    %23 = math.exp %22 : vector<8x128xf32>
    %cst_17 = arith.constant 1.000000e+00 : f32
    %24 = vector.broadcast %cst_17 : f32 to vector<8x128xf32>
    %25 = arith.addf %24, %23 : vector<8x128xf32>
    %26 = arith.divf %24, %25 : vector<8x128xf32>
    %c0_18 = arith.constant 0 : index
    %c0_19 = arith.constant 0 : index
    %27 = vector.load %arg8[%c0_18, %c0_19] : memref<8x128xf32, #tpu.memory_space<vmem>>, vector<8x128xf32>
    tpu.vector_store %arg8[%c0_18, %c0_19], %26 {strides = array<i32>} : memref<8x128xf32, #tpu.memory_space<vmem>>, vector<8x128xf32>,
    return
  }
  func.func @transform_0(%arg0: i32) -> (i32, i32) {
    %c0_i32 = arith.constant 0 : i32
    %c0_i32_0 = arith.constant 0 : i32
    return %arg0, %c0_i32 : i32, i32
  }
  func.func @transform_1(%arg0: i32) -> (i32, i32) {
    %c0_i32 = arith.constant 0 : i32
    %c0_i32_0 = arith.constant 0 : i32
    %c0_i32_1 = arith.constant 0 : i32
    return %c0_i32, %c0_i32_0 : i32, i32
  }
  func.func @transform_2(%arg0: i32) -> (i32, i32) {
    %c0_i32 = arith.constant 0 : i32
    %c0_i32_0 = arith.constant 0 : i32
    %c0_i32_1 = arith.constant 0 : i32
    return %c0_i32, %c0_i32_0 : i32, i32
  }
  func.func @transform_3(%arg0: i32) -> (i32, i32) {
    %c0_i32 = arith.constant 0 : i32
    %c0_i32_0 = arith.constant 0 : i32
    %c0_i32_1 = arith.constant 0 : i32
    return %c0_i32, %c0_i32_0 : i32, i32
  }
  func.func @transform_4(%arg0: i32) -> (i32, i32) {
    %c0_i32 = arith.constant 0 : i32
    %c0_i32_0 = arith.constant 0 : i32
    %c0_i32_1 = arith.constant 0 : i32
    return %c0_i32, %c0_i32_0 : i32, i32
  }
  func.func @transform_5(%arg0: i32) -> (i32, i32) {
    %c0_i32 = arith.constant 0 : i32
    %c0_i32_0 = arith.constant 0 : i32
    %c0_i32_1 = arith.constant 0 : i32
    return %c0_i32, %c0_i32_0 : i32, i32
  }
  func.func @transform_6(%arg0: i32) -> (i32, i32) {
    %c0_i32 = arith.constant 0 : i32
    %c0_i32_0 = arith.constant 0 : i32
    %c0_i32_1 = arith.constant 0 : i32
    return %c0_i32, %c0_i32_0 : i32, i32
  }
  func.func @transform_7(%arg0: i32) -> (i32, i32) {
    %c0_i32 = arith.constant 0 : i32
    %c0_i32_0 = arith.constant 0 : i32
    return %arg0, %c0_i32 : i32, i32
  }
}

</mosaic_0001>

<llo_original>
// kernel: _lambda_.1
$region0: #{_lambda_.1}
  #allocation0 [shape = 'u32[]', space=smem, size = 0x4, offset = 0x4, fixed_abs, tag = 'smem constant byte address 0x4 - core index']
  #allocation1 [shape = 'u32[72,128]{1,0:T(1,128)}', space=vmem, size = 0x9000, scoped, tag = 'internal scratch']
  %s0 = inlined_call_operand.vmem [shape: bf16[16,128], index: 0, kind: input, shape index: {}]
  %s1 = inlined_call_operand.hbm [shape: bf16[128,128], index: 1, kind: input, shape index: {}]
  %s2 = inlined_call_operand.vmem [shape: f32[1,128], index: 2, kind: input, shape index: {}, may-alias: {2,4,6}]
  %s3 = inlined_call_operand.hbm [shape: bf16[128,128], index: 3, kind: input, shape index: {}]
  %s4 = inlined_call_operand.vmem [shape: f32[1,128], index: 4, kind: input, shape index: {}, may-alias: {2,4,6}]
  %s5 = inlined_call_operand.hbm [shape: bf16[128,128], index: 5, kind: input, shape index: {}]
  %s6 = inlined_call_operand.vmem [shape: f32[1,128], index: 6, kind: input, shape index: {}, may-alias: {2,4,6}]
  %s7 = inlined_call_operand.vmem [shape: f32[16,128], index: 7, kind: output, shape index: {}]
  %s8 = sld [smem:[#allocation0]]
  $region73: #{_lambda_.1} parent=0
    _
  %s10 = ssub.s32 1, %s8
  %s11 = scalar_select 0, %s10, %s8
  $region1: #{_lambda_.1} parent=0
    #allocation2 [shape = 'u8[32768]{0}', space=vmem, size = 0x8000, scoped, tag = 'input window, operand 1, single buffered']
    #allocation3 [shape = 's32[2]{0}', space=sflag, size = 0x8, scoped, tag = 'scoped memory for _lambda_.1']
    #allocation4 [shape = 'u8[32768]{0}', space=vmem, size = 0x8000, scoped, tag = 'input window, operand 3, single buffered']
    #allocation5 [shape = 's32[1]{0}', space=sflag, size = 0x4, scoped, tag = 'scoped memory for _lambda_.1']
    #allocation6 [shape = 'u8[32768]{0}', space=vmem, size = 0x8000, scoped, tag = 'input window, operand 5, single buffered']
    %12 = vsyncpa [#allocation3], 0
    %13 = vsyncpa [#allocation5], 0
    loop: start=0, step=1, limit=4
    $region2: #{_lambda_.1} parent=1 // loop_pre_header
      _
    $region3: #{_lambda_.1} parent=1 // loop_header
      %s15 = sphi 0, %s19
      %p16 = scmp.ge.s32.totalorder %s15, 4
      %s25 = sphi 0, %s27
      %s28 = sphi 0, %s25
      %s29 = sphi 0, %s28
      %s45 = sphi 0, %s29
      %s49 = sphi 0, %s49
      %s51 = sphi 0, %s49
      %s52 = sphi 0, %s51
      %s66 = sphi 0, %s52
      %s70 = sphi 0, %s70
      %s72 = sphi 0, %s70
      %s73 = sphi 0, %s72
      %s87 = sphi 0, %s73
      %s91 = sphi 0, %s91
      %s93 = sphi 0, %s91
      %s94 = sphi 0, %s93
      %s108 = sphi 0, %s94
      %s112 = sphi 0, %s112
      %s114 = sphi 0, %s112
      %s115 = sphi 0, %s114
      %s129 = sphi 0, %s115
      %s133 = sphi 0, %s133
      %s135 = sphi 0, %s133
      %s136 = sphi 0, %s135
      %s150 = sphi 0, %s136
      %s154 = sphi 0, %s154
      %s156 = sphi 0, %s154
      %s157 = sphi 0, %s156
      %s171 = sphi 0, %s157
      %s177 = sphi 0, %s179
      %s180 = sphi 0, %s177
      %s181 = sphi 0, %s180
      %s197 = sphi 0, %s181
    $region4: #{_lambda_.1} parent=1 // loop_header_branch
      %18 = sbr.rel (%p16) target = $region8
    $region5: #{_lambda_.1} parent=1 // loop_body
      %s20 = ssub.s32 %s15, 1
      %s21 = ssub.s32 %s15, 2
      %s22 = sadd.s32 %s15, 1
      %s23 = ssub.s32 %s15, %s22
      %p24 = scmp.eq.s32.totalorder %s23, 0
      %s26 = sadd.s32 %s25, 1
      %s27 = scalar_select %p24, %s25, %s26
      %p30 = pneg %p24
      %p31 = scmp.eq.s32.totalorder %s15, 1
      %p32 = por %p30, %p31
      %p33 = scmp.ne.s32.totalorder %s25, %s28
      %p34 = scmp.eq.s32.totalorder %s15, 0
      %p35 = por %p33, %p34
      %p36 = scmp.ne.s32.totalorder %s25, %s28
      %p37 = scmp.eq.s32.totalorder %s20, 1
      %p38 = por %p36, %p37
      %p39 = scmp.ne.s32.totalorder %s28, %s29
      %p40 = scmp.eq.s32.totalorder %s20, 0
      %p41 = por %p39, %p40
      %p42 = scmp.ne.s32.totalorder %s28, %s29
      %p43 = scmp.eq.s32.totalorder %s21, 1
      %p44 = por %p42, %p43
      %p46 = scmp.ne.s32.totalorder %s29, %s45
      %p47 = scmp.eq.s32.totalorder %s21, 0
      %p48 = por %p46, %p47
      %s50 = sadd.s32 %s49, 1
      %p53 = scmp.eq.s32.totalorder %s15, 1
      %p54 = scmp.ne.s32.totalorder %s49, %s51
      %p55 = scmp.eq.s32.totalorder %s15, 0
      %p56 = por %p54, %p55
      %p57 = scmp.ne.s32.totalorder %s49, %s51
      %p58 = scmp.eq.s32.totalorder %s20, 1
      %p59 = por %p57, %p58
      %p60 = scmp.ne.s32.totalorder %s51, %s52
      %p61 = scmp.eq.s32.totalorder %s20, 0
      %p62 = por %p60, %p61
      %p63 = scmp.ne.s32.totalorder %s51, %s52
      %p64 = scmp.eq.s32.totalorder %s21, 1
      %p65 = por %p63, %p64
      %p67 = scmp.ne.s32.totalorder %s52, %s66
      %p68 = scmp.eq.s32.totalorder %s21, 0
      %p69 = por %p67, %p68
      %s71 = sadd.s32 %s70, 1
      %p74 = scmp.eq.s32.totalorder %s15, 1
      %p75 = scmp.ne.s32.totalorder %s70, %s72
      %p76 = scmp.eq.s32.totalorder %s15, 0
      %p77 = por %p75, %p76
      %p78 = scmp.ne.s32.totalorder %s70, %s72
      %p79 = scmp.eq.s32.totalorder %s20, 1
      %p80 = por %p78, %p79
      %p81 = scmp.ne.s32.totalorder %s72, %s73
      %p82 = scmp.eq.s32.totalorder %s20, 0
      %p83 = por %p81, %p82
      %p84 = scmp.ne.s32.totalorder %s72, %s73
      %p85 = scmp.eq.s32.totalorder %s21, 1
      %p86 = por %p84, %p85
      %p88 = scmp.ne.s32.totalorder %s73, %s87
      %p89 = scmp.eq.s32.totalorder %s21, 0
      %p90 = por %p88, %p89
      %s92 = sadd.s32 %s91, 1
      %p95 = scmp.eq.s32.totalorder %s15, 1
      %p96 = scmp.ne.s32.totalorder %s91, %s93
      %p97 = scmp.eq.s32.totalorder %s15, 0
      %p98 = por %p96, %p97
      %p99 = scmp.ne.s32.totalorder %s91, %s93
      %p100 = scmp.eq.s32.totalorder %s20, 1
      %p101 = por %p99, %p100
      %p102 = scmp.ne.s32.totalorder %s93, %s94
      %p103 = scmp.eq.s32.totalorder %s20, 0
      %p104 = por %p102, %p103
      %p105 = scmp.ne.s32.totalorder %s93, %s94
      %p106 = scmp.eq.s32.totalorder %s21, 1
      %p107 = por %p105, %p106
      %p109 = scmp.ne.s32.totalorder %s94, %s108
      %p110 = scmp.eq.s32.totalorder %s21, 0
      %p111 = por %p109, %p110
      %s113 = sadd.s32 %s112, 1
      %p116 = scmp.eq.s32.totalorder %s15, 1
      %p117 = scmp.ne.s32.totalorder %s112, %s114
      %p118 = scmp.eq.s32.totalorder %s15, 0
      %p119 = por %p117, %p118
      %p120 = scmp.ne.s32.totalorder %s112, %s114
      %p121 = scmp.eq.s32.totalorder %s20, 1
      %p122 = por %p120, %p121
      %p123 = scmp.ne.s32.totalorder %s114, %s115
      %p124 = scmp.eq.s32.totalorder %s20, 0
      %p125 = por %p123, %p124
      %p126 = scmp.ne.s32.totalorder %s114, %s115
      %p127 = scmp.eq.s32.totalorder %s21, 1
      %p128 = por %p126, %p127
      %p130 = scmp.ne.s32.totalorder %s115, %s129
      %p131 = scmp.eq.s32.totalorder %s21, 0
      %p132 = por %p130, %p131
      %s134 = sadd.s32 %s133, 1
      %p137 = scmp.eq.s32.totalorder %s15, 1
      %p138 = scmp.ne.s32.totalorder %s133, %s135
      %p139 = scmp.eq.s32.totalorder %s15, 0
      %p140 = por %p138, %p139
      %p141 = scmp.ne.s32.totalorder %s133, %s135
      %p142 = scmp.eq.s32.totalorder %s20, 1
      %p143 = por %p141, %p142
      %p144 = scmp.ne.s32.totalorder %s135, %s136
      %p145 = scmp.eq.s32.totalorder %s20, 0
      %p146 = por %p144, %p145
      %p147 = scmp.ne.s32.totalorder %s135, %s136
      %p148 = scmp.eq.s32.totalorder %s21, 1
      %p149 = por %p147, %p148
      %p151 = scmp.ne.s32.totalorder %s136, %s150
      %p152 = scmp.eq.s32.totalorder %s21, 0
      %p153 = por %p151, %p152
      %s155 = sadd.s32 %s154, 1
      %p158 = scmp.eq.s32.totalorder %s15, 1
      %p159 = scmp.ne.s32.totalorder %s154, %s156
      %p160 = scmp.eq.s32.totalorder %s15, 0
      %p161 = por %p159, %p160
      %p162 = scmp.ne.s32.totalorder %s154, %s156
      %p163 = scmp.eq.s32.totalorder %s20, 1
      %p164 = por %p162, %p163
      %p165 = scmp.ne.s32.totalorder %s156, %s157
      %p166 = scmp.eq.s32.totalorder %s20, 0
      %p167 = por %p165, %p166
      %p168 = scmp.ne.s32.totalorder %s156, %s157
      %p169 = scmp.eq.s32.totalorder %s21, 1
      %p170 = por %p168, %p169
      %p172 = scmp.ne.s32.totalorder %s157, %s171
      %p173 = scmp.eq.s32.totalorder %s21, 0
      %p174 = por %p172, %p173
      %s175 = ssub.s32 %s15, %s22
      %p176 = scmp.eq.s32.totalorder %s175, 0
      %s178 = sadd.s32 %s177, 1
      %s179 = scalar_select %p176, %s177, %s178
      %p182 = pneg %p176
      %p183 = scmp.eq.s32.totalorder %s15, 1
      %p184 = por %p182, %p183
      %p185 = scmp.ne.s32.totalorder %s177, %s180
      %p186 = scmp.eq.s32.totalorder %s15, 0
      %p187 = por %p185, %p186
      %p188 = scmp.ne.s32.totalorder %s177, %s180
      %p189 = scmp.eq.s32.totalorder %s20, 1
      %p190 = por %p188, %p189
      %p191 = scmp.ne.s32.totalorder %s180, %s181
      %p192 = scmp.eq.s32.totalorder %s20, 0
      %p193 = por %p191, %p192
      %p194 = scmp.ne.s32.totalorder %s180, %s181
      %p195 = scmp.eq.s32.totalorder %s21, 1
      %p196 = por %p194, %p195
      %p198 = scmp.ne.s32.totalorder %s181, %s197
      %p199 = scmp.eq.s32.totalorder %s21, 0
      %p200 = por %p198, %p199
      %p201 = scmp.le.s32.totalorder 1, %s15
      %p202 = scmp.lt.s32.totalorder %s15, 3
      %p203 = pnand %p201, %p202
      %p204 = pneg %p203
      // Predicated region
      $region9: #{_lambda_.1} parent=5 // pred_check
        _
      $region10: #{_lambda_.1} parent=5 // pred_check_branch
        %206 = sbr.rel (%p203) target = $region12
      $region11: #{_lambda_.1} parent=5 // pred_region
        %s207 = ssub.s32 %s15, 1
        // Predicated region
        $region13: #{_lambda_.1} parent=11 // pred_check
          %p208 = pneg %p62
        $region14: #{_lambda_.1} parent=11 // pred_check_branch
          %210 = sbr.rel (%p208) target = $region16
        $region15: #{_lambda_.1} parent=11 // pred_region
          %212 = vsyncadd [#allocation3], 0
          %s213 = sshll.u32 %s1, 4
          %s214 = int_to_ptr.hbm [resolvable:$true] %s213
          %s215 = sshll.u32 [#allocation2], 4
          %s216 = int_to_ptr.vmem [resolvable:$true] %s215
          %221 = dma.hbm_to_vmem [thread:$0]  %s214, 1024, %s216, [#allocation3], 64, 64, 4
        $region16: #{_lambda_.1} parent=11 // pred_fallthru
          _
        // Predicated region
        $region17: #{_lambda_.1} parent=11 // pred_check
          %p222 = pneg %p83
        $region18: #{_lambda_.1} parent=11 // pred_check_branch
          %224 = sbr.rel (%p222) target = $region20
        $region19: #{_lambda_.1} parent=11 // pred_region
          _
        $region20: #{_lambda_.1} parent=11 // pred_fallthru
          _
        // Predicated region
        $region21: #{_lambda_.1} parent=11 // pred_check
          %p225 = pneg %p104
        $region22: #{_lambda_.1} parent=11 // pred_check_branch
          %227 = sbr.rel (%p225) target = $region24
        $region23: #{_lambda_.1} parent=11 // pred_region
          %229 = vsyncadd [#allocation5], 0
          %s230 = sshll.u32 %s3, 4
          %s231 = int_to_ptr.hbm [resolvable:$true] %s230
          %s232 = sshll.u32 [#allocation4], 4
          %s233 = int_to_ptr.vmem [resolvable:$true] %s232
          %238 = dma.hbm_to_vmem [thread:$0]  %s231, 1024, %s233, [#allocation5], 64, 64, 4
        $region24: #{_lambda_.1} parent=11 // pred_fallthru
          _
        // Predicated region
        $region25: #{_lambda_.1} parent=11 // pred_check
          %p239 = pneg %p125
        $region26: #{_lambda_.1} parent=11 // pred_check_branch
          %241 = sbr.rel (%p239) target = $region28
        $region27: #{_lambda_.1} parent=11 // pred_region
          _
        $region28: #{_lambda_.1} parent=11 // pred_fallthru
          _
        // Predicated region
        $region29: #{_lambda_.1} parent=11 // pred_check
          %p242 = pneg %p146
        $region30: #{_lambda_.1} parent=11 // pred_check_branch
          %244 = sbr.rel (%p242) target = $region32
        $region31: #{_lambda_.1} parent=11 // pred_region
          %246 = vsyncadd [#allocation5], 0
          %s247 = sshll.u32 %s5, 4
          %s248 = int_to_ptr.hbm [resolvable:$true] %s247
          %s249 = sshll.u32 [#allocation6], 4
          %s250 = int_to_ptr.vmem [resolvable:$true] %s249
          %255 = dma.hbm_to_vmem [thread:$0]  %s248, 1024, %s250, [#allocation5], 64, 64, 4
        $region32: #{_lambda_.1} parent=11 // pred_fallthru
          _
        // Predicated region
        $region33: #{_lambda_.1} parent=11 // pred_check
          %p256 = pneg %p167
        $region34: #{_lambda_.1} parent=11 // pred_check_branch
          %258 = sbr.rel (%p256) target = $region36
        $region35: #{_lambda_.1} parent=11 // pred_region
          _
        $region36: #{_lambda_.1} parent=11 // pred_fallthru
          _
      $region12: #{_lambda_.1} parent=5 // pred_fallthru
        _
      %p259 = scmp.lt.s32.totalorder %s15, 2
      // Predicated region
      $region37: #{_lambda_.1} parent=5 // pred_check
        %p260 = pneg %p259
      $region38: #{_lambda_.1} parent=5 // pred_check_branch
        %262 = sbr.rel (%p260) target = $region40
      $region39: #{_lambda_.1} parent=5 // pred_region
        // Predicated region
        $region41: #{_lambda_.1} parent=39 // pred_check
          %p263 = pneg %p35
        $region42: #{_lambda_.1} parent=39 // pred_check_branch
          %265 = sbr.rel (%p263) target = $region44
        $region43: #{_lambda_.1} parent=39 // pred_region
          %p266 = scmp.lt.s32.totalorder %s15, 1
          %s267 = scalar_select %p266, %s15, 1
          %s268 = smul.addr %s267, 4
          %s269 = scalar_lea.vmem %s0, %s268
        $region44: #{_lambda_.1} parent=39 // pred_fallthru
          _
      $region40: #{_lambda_.1} parent=5 // pred_fallthru
        _
      %p270 = scmp.le.s32.totalorder 1, %s15
      %p271 = scmp.lt.s32.totalorder %s15, 3
      %p272 = pnand %p270, %p271
      %p273 = pneg %p272
      // Predicated region
      $region45: #{_lambda_.1} parent=5 // pred_check
        _
      $region46: #{_lambda_.1} parent=5 // pred_check_branch
        %275 = sbr.rel (%p272) target = $region48
      $region47: #{_lambda_.1} parent=5 // pred_region
        %s276 = ssub.s32 %s15, 1
        // Predicated region
        $region49: #{_lambda_.1} parent=47 // pred_check
          %p277 = pneg %p62
        $region50: #{_lambda_.1} parent=47 // pred_check_branch
          %279 = sbr.rel (%p277) target = $region52
        $region51: #{_lambda_.1} parent=47 // pred_region
          %281 = dma.done [#allocation3], 1024
        $region52: #{_lambda_.1} parent=47 // pred_fallthru
          _
        // Predicated region
        $region53: #{_lambda_.1} parent=47 // pred_check
          %p282 = pneg %p104
        $region54: #{_lambda_.1} parent=47 // pred_check_branch
          %284 = sbr.rel (%p282) target = $region56
        $region55: #{_lambda_.1} parent=47 // pred_region
          %286 = dma.done [#allocation5], 1024
        $region56: #{_lambda_.1} parent=47 // pred_fallthru
          _
        // Predicated region
        $region57: #{_lambda_.1} parent=47 // pred_check
          %p287 = pneg %p146
        $region58: #{_lambda_.1} parent=47 // pred_check_branch
          %289 = sbr.rel (%p287) target = $region60
        $region59: #{_lambda_.1} parent=47 // pred_region
          %291 = dma.done [#allocation5], 1024
        $region60: #{_lambda_.1} parent=47 // pred_fallthru
          _
        %p292 = scmp.lt.s32.totalorder %s20, 1
        %s293 = scalar_select %p292, %s20, 1
        %s294 = smul.addr %s293, 4
        %s295 = scalar_lea.vmem %s0, %s294
        %p296 = pneg %p41
        %p297 = pneg %p38
        %p298 = pneg %p62
        %p299 = pneg %p59
        %p300 = pneg %p83
        %p301 = pneg %p80
        %p302 = pneg %p104
        %p303 = pneg %p101
        %p304 = pneg %p125
        %p305 = pneg %p122
        %p306 = pneg %p146
        %p307 = pneg %p143
        %p308 = pneg %p167
        %p309 = pneg %p164
        %p310 = pneg %p193
        %p311 = pneg %p190
        %p312 = scmp.lt.s32.totalorder %s20, 1
        %s313 = scalar_select %p312, %s20, 1
        %s314 = smul.addr %s313, 8
        %s315 = scalar_lea.vmem %s7, %s314
        %p316 = scmp.lt.s32.totalorder %s20, 1
        %s317 = scalar_select %p316, %s20, 1
        %s318 = smul.addr %s317, 4
        %s319 = scalar_lea.vmem %s0, %s318
        %p320 = scmp.lt.s32.totalorder %s20, 1
        %s321 = scalar_select %p320, %s20, 1
        %s322 = smul.addr %s321, 8
        %s323 = scalar_lea.vmem %s7, %s322
        %v324 = vld [vmem:[%s319] sm:$0xf]
        %v325 = vld [vmem:[#allocation2] sm:$0xf]
        %v326 = vld [vmem:[#allocation2 + $0x4] sm:$0xf]
        %v327 = vld [vmem:[#allocation2 + $0x8] sm:$0xf]
        %v328 = vld [vmem:[#allocation2 + $0xc] sm:$0xf]
        %v329 = vld [vmem:[#allocation2 + $0x10] sm:$0xf]
        %v330 = vld [vmem:[#allocation2 + $0x14] sm:$0xf]
        %v331 = vld [vmem:[#allocation2 + $0x18] sm:$0xf]
        %v332 = vld [vmem:[#allocation2 + $0x1c] sm:$0xf]
        %v333 = vld [vmem:[#allocation2 + $0x20] sm:$0xf]
        %v334 = vld [vmem:[#allocation2 + $0x24] sm:$0xf]
        %v335 = vld [vmem:[#allocation2 + $0x28] sm:$0xf]
        %v336 = vld [vmem:[#allocation2 + $0x2c] sm:$0xf]
        %v337 = vld [vmem:[#allocation2 + $0x30] sm:$0xf]
        %v338 = vld [vmem:[#allocation2 + $0x34] sm:$0xf]
        %v339 = vld [vmem:[#allocation2 + $0x38] sm:$0xf]
        %v340 = vld [vmem:[#allocation2 + $0x3c] sm:$0xf]
        %v341 = vld [vmem:[%s2] sm:$0x1]
        %v343 = vperm.slane %v341, 0
        %v361 = vunpack.c.l.b16 %v325
        %v362 = vunpack.c.l.b16 %v326
        %v363 = vunpack.c.l.b16 %v327
        %v364 = vunpack.c.l.b16 %v328
        %v365 = vunpack.c.l.b16 %v329
        %v366 = vunpack.c.l.b16 %v330
        %v367 = vunpack.c.l.b16 %v331
        %v368 = vunpack.c.l.b16 %v332
        %v369 = vunpack.c.l.b16 %v333
        %v370 = vunpack.c.l.b16 %v334
        %v371 = vunpack.c.l.b16 %v335
        %v372 = vunpack.c.l.b16 %v336
        %v373 = vunpack.c.l.b16 %v337
        %v374 = vunpack.c.l.b16 %v338
        %v375 = vunpack.c.l.b16 %v339
        %v376 = vunpack.c.l.b16 %v340
        %v377 = vpack.c.b16 %v362, %v361
        %v378 = vpack.c.b16 %v364, %v363
        %v379 = vpack.c.b16 %v366, %v365
        %v380 = vpack.c.b16 %v368, %v367
        %v381 = vpack.c.b16 %v370, %v369
        %v382 = vpack.c.b16 %v372, %v371
        %v383 = vpack.c.b16 %v374, %v373
        %v384 = vpack.c.b16 %v376, %v375
        %393 = vmatpush.bf16.msra.mxu0 %v384
        %394 = vmatpush.bf16.msra.mxu0 %v383
        %395 = vmatpush.bf16.msra.mxu0 %v382
        %396 = vmatpush.bf16.msra.mxu0 %v381
        %397 = vmatpush.bf16.msra.mxu0 %v380
        %398 = vmatpush.bf16.msra.mxu0 %v379
        %399 = vmatpush.bf16.msra.mxu0 %v378
        %400 = vmatpush.bf16.msra.mxu0 %v377
        %401 = vmatmul.bf16.gmra.mxu0 %v324
        %v402 = vpop.f32.mrf.mxu0
        %v403 = vadd.f32 %v343, %v402
        %v404 = vpop.f32.mrf.mxu0
        %405 = vdwg.mxu0
        %v406 = vmax.f32 %v403, 0.0
        %v407 = vpack.c.bf16 %v406, %v406
        %v408 = vld [vmem:[#allocation4] sm:$0xf]
        %v409 = vld [vmem:[#allocation4 + $0x4] sm:$0xf]
        %v410 = vld [vmem:[#allocation4 + $0x8] sm:$0xf]
        %v411 = vld [vmem:[#allocation4 + $0xc] sm:$0xf]
        %v412 = vld [vmem:[#allocation4 + $0x10] sm:$0xf]
        %v413 = vld [vmem:[#allocation4 + $0x14] sm:$0xf]
        %v414 = vld [vmem:[#allocation4 + $0x18] sm:$0xf]
        %v415 = vld [vmem:[#allocation4 + $0x1c] sm:$0xf]
        %v416 = vld [vmem:[#allocation4 + $0x20] sm:$0xf]
        %v417 = vld [vmem:[#allocation4 + $0x24] sm:$0xf]
        %v418 = vld [vmem:[#allocation4 + $0x28] sm:$0xf]
        %v419 = vld [vmem:[#allocation4 + $0x2c] sm:$0xf]
        %v420 = vld [vmem:[#allocation4 + $0x30] sm:$0xf]
        %v421 = vld [vmem:[#allocation4 + $0x34] sm:$0xf]
        %v422 = vld [vmem:[#allocation4 + $0x38] sm:$0xf]
        %v423 = vld [vmem:[#allocation4 + $0x3c] sm:$0xf]
        %v424 = vld [vmem:[%s4] sm:$0x1]
        %v426 = vperm.slane %v424, 0
        %v444 = vunpack.c.l.b16 %v408
        %v445 = vunpack.c.l.b16 %v409
        %v446 = vunpack.c.l.b16 %v410
        %v447 = vunpack.c.l.b16 %v411
        %v448 = vunpack.c.l.b16 %v412
        %v449 = vunpack.c.l.b16 %v413
        %v450 = vunpack.c.l.b16 %v414
        %v451 = vunpack.c.l.b16 %v415
        %v452 = vunpack.c.l.b16 %v416
        %v453 = vunpack.c.l.b16 %v417
        %v454 = vunpack.c.l.b16 %v418
        %v455 = vunpack.c.l.b16 %v419
        %v456 = vunpack.c.l.b16 %v420
        %v457 = vunpack.c.l.b16 %v421
        %v458 = vunpack.c.l.b16 %v422
        %v459 = vunpack.c.l.b16 %v423
        %v460 = vpack.c.b16 %v445, %v444
        %v461 = vpack.c.b16 %v447, %v446
        %v462 = vpack.c.b16 %v449, %v448
        %v463 = vpack.c.b16 %v451, %v450
        %v464 = vpack.c.b16 %v453, %v452
        %v465 = vpack.c.b16 %v455, %v454
        %v466 = vpack.c.b16 %v457, %v456
        %v467 = vpack.c.b16 %v459, %v458
        %476 = vmatpush.bf16.msra.mxu0 %v467
        %477 = vmatpush.bf16.msra.mxu0 %v466
        %478 = vmatpush.bf16.msra.mxu0 %v465
        %479 = vmatpush.bf16.msra.mxu0 %v464
        %480 = vmatpush.bf16.msra.mxu0 %v463
        %481 = vmatpush.bf16.msra.mxu0 %v462
        %482 = vmatpush.bf16.msra.mxu0 %v461
        %483 = vmatpush.bf16.msra.mxu0 %v460
        %484 = vmatmul.bf16.gmra.mxu0 %v407
        %v485 = vpop.f32.mrf.mxu0
        %v486 = vadd.f32 %v426, %v485
        %v487 = vpop.f32.mrf.mxu0
        %488 = vdwg.mxu0
        %v489 = vmax.f32 %v486, 0.0
        %v490 = vpack.c.bf16 %v489, %v489
        %v491 = vld [vmem:[#allocation6] sm:$0xf]
        %v492 = vld [vmem:[#allocation6 + $0x4] sm:$0xf]
        %v493 = vld [vmem:[#allocation6 + $0x8] sm:$0xf]
        %v494 = vld [vmem:[#allocation6 + $0xc] sm:$0xf]
        %v495 = vld [vmem:[#allocation6 + $0x10] sm:$0xf]
        %v496 = vld [vmem:[#allocation6 + $0x14] sm:$0xf]
        %v497 = vld [vmem:[#allocation6 + $0x18] sm:$0xf]
        %v498 = vld [vmem:[#allocation6 + $0x1c] sm:$0xf]
        %v499 = vld [vmem:[#allocation6 + $0x20] sm:$0xf]
        %v500 = vld [vmem:[#allocation6 + $0x24] sm:$0xf]
        %v501 = vld [vmem:[#allocation6 + $0x28] sm:$0xf]
        %v502 = vld [vmem:[#allocation6 + $0x2c] sm:$0xf]
        %v503 = vld [vmem:[#allocation6 + $0x30] sm:$0xf]
        %v504 = vld [vmem:[#allocation6 + $0x34] sm:$0xf]
        %v505 = vld [vmem:[#allocation6 + $0x38] sm:$0xf]
        %v506 = vld [vmem:[#allocation6 + $0x3c] sm:$0xf]
        %v507 = vld [vmem:[%s6] sm:$0x1]
        %v509 = vperm.slane %v507, 0
        %v527 = vunpack.c.l.b16 %v491
        %v528 = vunpack.c.l.b16 %v492
        %v529 = vunpack.c.l.b16 %v493
        %v530 = vunpack.c.l.b16 %v494
        %v531 = vunpack.c.l.b16 %v495
        %v532 = vunpack.c.l.b16 %v496
        %v533 = vunpack.c.l.b16 %v497
        %v534 = vunpack.c.l.b16 %v498
        %v535 = vunpack.c.l.b16 %v499
        %v536 = vunpack.c.l.b16 %v500
        %v537 = vunpack.c.l.b16 %v501
        %v538 = vunpack.c.l.b16 %v502
        %v539 = vunpack.c.l.b16 %v503
        %v540 = vunpack.c.l.b16 %v504
        %v541 = vunpack.c.l.b16 %v505
        %v542 = vunpack.c.l.b16 %v506
        %v543 = vpack.c.b16 %v528, %v527
        %v544 = vpack.c.b16 %v530, %v529
        %v545 = vpack.c.b16 %v532, %v531
        %v546 = vpack.c.b16 %v534, %v533
        %v547 = vpack.c.b16 %v536, %v535
        %v548 = vpack.c.b16 %v538, %v537
        %v549 = vpack.c.b16 %v540, %v539
        %v550 = vpack.c.b16 %v542, %v541
        %559 = vmatpush.bf16.msra.mxu0 %v550
        %560 = vmatpush.bf16.msra.mxu0 %v549
        %561 = vmatpush.bf16.msra.mxu0 %v548
        %562 = vmatpush.bf16.msra.mxu0 %v547
        %563 = vmatpush.bf16.msra.mxu0 %v546
        %564 = vmatpush.bf16.msra.mxu0 %v545
        %565 = vmatpush.bf16.msra.mxu0 %v544
        %566 = vmatpush.bf16.msra.mxu0 %v543
        %567 = vmatmul.bf16.gmra.mxu0 %v490
        %v568 = vpop.f32.mrf.mxu0
        %v569 = vadd.f32 %v509, %v568
        %v570 = vpop.f32.mrf.mxu0
        %571 = vdwg.mxu0
        %v572 = vxor.u32 %v569, 2147483648
        %v573 = vmul.f32 %v572, 1.442695
        %v574 = vpow.pop %v573
        %v575 = vadd.f32 %v574, 1.0
        %v576 = vrcp.pop %v575
        %v577 = vmul.f32 %v575, %v576
        %v578 = vsub.f32 1.0, %v577
        %v579 = vmul.f32 %v576, %v578
        %v580 = vadd.f32 %v576, %v579
        %vm581 = vweird.f32 %v575
        %vm582 = vweird.f32 %v576
        %vm583 = vmor %vm581, %vm582
        %v584 = vsel %vm583, %v576, %v580
        %v585 = vand.u32 2147483647, %v575
        %vm586 = vcmp.eq.f32.partialorder %v585, 8.507059e+37
        %v587 = vand.u32 %v575, 2147483648
        %v588 = vor.u32 1.1754944e-38, %v587
        %v589 = vsel %vm586, %v588, %v584
        %v590 = vmul.f32 1.0, %v589
        %591 = vst [vmem:[%s323] sm:$0xff] %v590
        %p592 = scmp.lt.s32.totalorder %s20, 1
        %s593 = scalar_select %p592, %s20, 1
        %s594 = smul.addr %s593, 8
        %s595 = scalar_lea.vmem %s7, %s594
        // Predicated region
        $region61: #{_lambda_.1} parent=47 // pred_check
          %p596 = pneg %p190
        $region62: #{_lambda_.1} parent=47 // pred_check_branch
          %598 = sbr.rel (%p596) target = $region64
        $region63: #{_lambda_.1} parent=47 // pred_region
          _
        $region64: #{_lambda_.1} parent=47 // pred_fallthru
          _
      $region48: #{_lambda_.1} parent=5 // pred_fallthru
        _
      %p599 = scmp.le.s32.totalorder 2, %s15
      // Predicated region
      $region65: #{_lambda_.1} parent=5 // pred_check
        %p600 = pneg %p599
      $region66: #{_lambda_.1} parent=5 // pred_check_branch
        %602 = sbr.rel (%p600) target = $region68
      $region67: #{_lambda_.1} parent=5 // pred_region
        %s603 = ssub.s32 %s15, 2
        // Predicated region
        $region69: #{_lambda_.1} parent=67 // pred_check
          %p604 = pneg %p196
        $region70: #{_lambda_.1} parent=67 // pred_check_branch
          %606 = sbr.rel (%p604) target = $region72
        $region71: #{_lambda_.1} parent=67 // pred_region
          %p607 = scmp.lt.s32.totalorder %s21, 1
          %s608 = scalar_select %p607, %s21, 1
          %s609 = smul.addr %s608, 8
          %s610 = scalar_lea.vmem %s7, %s609
        $region72: #{_lambda_.1} parent=67 // pred_fallthru
          _
      $region68: #{_lambda_.1} parent=5 // pred_fallthru
        _
    $region6: #{_lambda_.1} parent=1 // loop_footer
      %s19 = sadd.s32 1, %s15
    $region7: #{_lambda_.1} parent=1 // loop_footer_branch
      %14 = sbr.rel target = $region3
    $region8: #{_lambda_.1} parent=1 // loop_exit
      _
    %611 = vsyncpa [#allocation3], 1
    %s612 = scalar_lea.sflag [#allocation3], 1
    %613 = vsyncpa %s612, 1
    %614 = vsyncpa [#allocation5], 1

</llo_original>
